<compile_context>
chip_gen: v5e
topology: v5e:2x2
jax: 0.10.0
libtpu: 0.0.40
codegen_flags: <defaults>
</compile_context>

<pallas_src>
import functools

import numpy as np

import jax
import jax.numpy as jnp
from jax.experimental import pallas as pl
from jax.experimental.pallas import tpu as pltpu

CLAMP_MIN = 0.05
CLAMP_MAX = 0.43

# 3x3 tap offsets (a, b) = (kh - 1, kw - 1), in the same order as the OIHW
# weight laid out as w1.reshape(2, 9)[oc, kh * 3 + kw].
_TAPS = [(a, b) for a in (-1, 0, 1) for b in (-1, 0, 1)]


def _boundary_masks(H, W):
    """(9, H*W) float32: 1.0 where the tap source (i+a, j+b) is in range."""
    i = np.arange(H)[:, None]
    j = np.arange(W)[None, :]
    masks = []
    for a, b in _TAPS:
        valid = (i + a >= 0) & (i + a < H) & (j + b >= 0) & (j + b < W)
        masks.append(valid.reshape(-1))
    return np.stack(masks).astype(np.float32)


def _pick_batch_block(N, HW):
    """Batch elements per grid step.

    Tiny N -> one step (block dims equal full array dims).  Larger N -> a
    multiple of 8 sized so (double-buffered in + 2ch out blocks) plus the ~3
    live (Nb, HW) f32 working arrays stay around ~12 MiB (safe for v5e's
    16 MiB scoped default and v7x's 64 MiB physical VMEM).  Capped so the
    grid has at least 2 parallel steps when N >= 16 (v7x megacore).
    """
    if N <= 8:
        return N
    budget = 12 << 20                         # bytes
    per_elem = (1 + 2) * HW * 4 * 2 + 3 * HW * 4   # dbl-buffered blocks + temps
    nb = min(N, max(8, budget // max(per_elem, 1)))
    nb -= nb % 8
    nb = max(8, nb)
    if N >= 16:
        half = (N // 2) - (N // 2) % 8
        if half >= 8:
            nb = min(nb, half)
    return nb


def _conv_clamp_kernel(x_ref, mw_ref, b1_ref, w2_ref, b2_ref, out_ref, *, H, W):
    """One grid step processes a block of Nb batch elements.

    x_ref    : (Nb, H*W)    VMEM  flattened (lane-dense) input
    mw_ref   : (18, H*W)    VMEM  pre-folded boundary_mask * conv1_weight
                                  row (oc*9 + k) for tap k of channel oc
    b1_ref   : (2,)         SMEM  conv1 bias
    w2_ref   : (2, 2)       SMEM  1x1 conv weight (out_ch, in_ch)
    b2_ref   : (2,)         SMEM  1x1 conv bias
    out_ref  : (Nb, 2*H*W)  VMEM  channel-major flattened output
    """
    HW = H * W
    x = x_ref[...]                              # (Nb, HW) f32

    # --- 3x3 conv (1 -> 2 channels): per tap, one XLU roll shared by both
    # output channels, multiplied straight into the two accumulators.  The
    # mask folded into mw zeroes exactly the positions whose padded source is
    # out of range (including roll wrap-around / cross-row bleed), which
    # reproduces the conv's zero padding.
    acc0 = None
    acc1 = None
    for k, (a, b) in enumerate(_TAPS):
        d = a * W + b
        t = x if d == 0 else pltpu.roll(x, shift=(-d) % HW, axis=1)
        c0 = t * mw_ref[pl.ds(k, 1), :]         # (Nb,HW) * (1,HW) bcast
        c1 = t * mw_ref[pl.ds(9 + k, 1), :]
        if acc0 is None:
            acc0, acc1 = c0, c1
        else:
            acc0 = acc0 + c0
            acc1 = acc1 + c1

    v3_0 = jnp.minimum(jnp.maximum(acc0 + b1_ref[0], CLAMP_MIN), CLAMP_MAX)
    v3_1 = jnp.minimum(jnp.maximum(acc1 + b1_ref[1], CLAMP_MIN), CLAMP_MAX)

    # --- 1x1 conv (2 -> 2 channels) per-pixel channel mix, then clamp ---
    o0 = v3_0 * w2_ref[0, 0] + v3_1 * w2_ref[0, 1] + b2_ref[0]
    o1 = v3_0 * w2_ref[1, 0] + v3_1 * w2_ref[1, 1] + b2_ref[1]
    o0 = jnp.minimum(jnp.maximum(o0, CLAMP_MIN), CLAMP_MAX)
    o1 = jnp.minimum(jnp.maximum(o1, CLAMP_MIN), CLAMP_MAX)

    # Two aligned, lane-dense slice stores (H*W is a multiple of 128), no
    # concatenate temporary.
    out_ref[:, 0:HW] = o0
    out_ref[:, HW:2 * HW] = o1


def model_forward(x1, x2, w1, b1, w2, b2):
    """x1: (N, 1, H, W) float32 (NCHW).  x2 is unused (matches torch module)."""
    del x2  # unused in the reference forward pass
    N, Cin, H, W = x1.shape
    assert Cin == 1
    HW = H * W

    xf = x1.reshape(N, HW)                    # metadata-only reshape
    w1f = w1.reshape(2, 9)                    # (out_ch, kh*3 + kw)
    w2f = w2[:, :, 0, 0]                      # (out_ch, in_ch)
    masks = jnp.asarray(_boundary_masks(H, W))          # (9, HW) f32
    # Pre-fold boundary mask * conv1 weight -> (18, HW); tiny, fetched once.
    mw = (w1f[:, :, None] * masks[None, :, :]).reshape(18, HW)

    Nb = _pick_batch_block(N, HW)
    grid = (pl.cdiv(N, Nb),)

    smem = pl.BlockSpec(memory_space=pltpu.MemorySpace.SMEM)
    kernel = functools.partial(_conv_clamp_kernel, H=H, W=W)

    cost = pl.CostEstimate(
        flops=52 * N * HW,                    # ~52 VPU ops per output pixel
        transcendentals=0,
        bytes_accessed=(3 * N * HW + 18 * HW) * 4,
    )

    out_flat = pl.pallas_call(
        kernel,
        out_shape=jax.ShapeDtypeStruct((N, 2 * HW), jnp.float32),
        grid_spec=pl.GridSpec(
            grid=grid,
            in_specs=[
                pl.BlockSpec((Nb, HW), lambda g: (g, 0)),    # x (batch block)
                pl.BlockSpec((18, HW), lambda g: (0, 0)),    # mask*weight table
                smem,   # b1
                smem,   # w2
                smem,   # b2
            ],
            out_specs=pl.BlockSpec((Nb, 2 * HW), lambda g: (g, 0)),
        ),
        compiler_params=pltpu.CompilerParams(
            dimension_semantics=("parallel",),   # shard batch blocks (v7x 2-TC)
            vmem_limit_bytes=32 * 1024 * 1024,
        ),
        cost_estimate=cost,
    )(xf, mw, b1, w2f, b2)

    return out_flat.reshape(N, 2, H, W)          # free reshape back to NCHW


def _reference_forward(x1, w1, b1, w2, b2):
    """Pure-JAX reference (lax conv) for a correctness sanity check."""
    dn = jax.lax.conv_dimension_numbers(x1.shape, w1.shape,
                                        ("NCHW", "OIHW", "NCHW"))
    v1 = jax.lax.conv_general_dilated(x1, w1, (1, 1), ((1, 1), (1, 1)),
                                      dimension_numbers=dn)
    v1 = v1 + b1[None, :, None, None]
    v3 = jnp.clip(v1, CLAMP_MIN, CLAMP_MAX)
    dn2 = jax.lax.conv_dimension_numbers(v3.shape, w2.shape,
                                         ("NCHW", "OIHW", "NCHW"))
    v4 = jax.lax.conv_general_dilated(v3, w2, (1, 1), ((0, 0), (0, 0)),
                                      dimension_numbers=dn2)
    v4 = v4 + b2[None, :, None, None]
    return jnp.clip(v4, CLAMP_MIN, CLAMP_MAX)


if __name__ == "__main__":
    key = jax.random.PRNGKey(0)
    k_x1, k_x2, k_w1, k_b1, k_w2, k_b2 = jax.random.split(key, 6)

    # Small shapes consistent with the module (N, C=1, H, W); H*W = 256.
    N, H, W = 2, 16, 16
    x1 = jax.random.normal(k_x1, (N, 1, H, W), dtype=jnp.float32)
    x2 = jax.random.normal(k_x2, (N, 1, H, W), dtype=jnp.float32)  # unused

    # Deterministic parameter init (PyTorch-style uniform(-1/sqrt(fan_in), ..)).
    fan1 = 1 * 3 * 3
    bound1 = 1.0 / jnp.sqrt(fan1)
    w1 = jax.random.uniform(k_w1, (2, 1, 3, 3), jnp.float32, -bound1, bound1)
    b1 = jax.random.uniform(k_b1, (2,), jnp.float32, -bound1, bound1)
    fan2 = 2 * 1 * 1
    bound2 = 1.0 / jnp.sqrt(fan2)
    w2 = jax.random.uniform(k_w2, (2, 2, 1, 1), jnp.float32, -bound2, bound2)
    b2 = jax.random.uniform(k_b2, (2,), jnp.float32, -bound2, bound2)

    out = model_forward(x1, x2, w1, b1, w2, b2)
    out = jax.block_until_ready(out)

    ref = _reference_forward(x1, w1, b1, w2, b2)
    assert out.shape == (N, 2, H, W)
    assert jnp.allclose(out, ref, atol=1e-5, rtol=1e-5), "mismatch vs reference"

    print("KERNEL_OK")
</pallas_src>

<mosaic_0001>
module attributes {stable_mosaic.version = 11 : i64} {
  func.func @_conv_clamp_kernel(%arg0: i32, %arg1: memref<2x256xf32, #tpu.memory_space<vmem>>, %arg2: memref<18x256xf32, #tpu.memory_space<vmem>>, %arg3: memref<2xf32, #tpu.memory_space<smem>>, %arg4: memref<2x2xf32, #tpu.memory_space<smem>>, %arg5: memref<2xf32, #tpu.memory_space<smem>>, %arg6: memref<2x512xf32, #tpu.memory_space<vmem>>) attributes {dimension_semantics = [#tpu.dimension_semantics<parallel>], iteration_bounds = array<i64: 1>, scalar_prefetch = 0 : i64, scratch_operands = 0 : i64, tpu.core_type = #tpu.core_type<tc>, window_params = [{transform_indices = @transform_0, window_bounds = array<i64: 2, 256>}, {pipeline_mode = #tpu.pipeline_mode<synchronous>, transform_indices = @transform_1, window_bounds = array<i64: 18, 256>}, {transform_indices = @transform_2, window_bounds = array<i64: 2>}, {transform_indices = @transform_3, window_bounds = array<i64: 2, 2>}, {transform_indices = @transform_4, window_bounds = array<i64: 2>}, {transform_indices = @transform_5, window_bounds = array<i64: 2, 512>}]} {
    %c0 = arith.constant 0 : index
    %c0_0 = arith.constant 0 : index
    %0 = vector.load %arg1[%c0, %c0_0] : memref<2x256xf32, #tpu.memory_space<vmem>>, vector<2x256xf32>
    %c17_i32 = arith.constant 17 : i32
    %1 = tpu.dynamic_rotate %0 by %c17_i32 dim 1 : vector<2x256xf32>, i32 -> vector<2x256xf32>
    %c0_1 = arith.constant 0 : index
    %c0_2 = arith.constant 0 : index
    %2 = vector.load %arg2[%c0_1, %c0_2] : memref<18x256xf32, #tpu.memory_space<vmem>>, vector<1x256xf32>
    %3 = vector.broadcast %2 : vector<1x256xf32> to vector<2x256xf32>
    %4 = arith.mulf %1, %3 : vector<2x256xf32>
    %c9 = arith.constant 9 : index
    %c0_3 = arith.constant 0 : index
    %5 = vector.load %arg2[%c9, %c0_3] : memref<18x256xf32, #tpu.memory_space<vmem>>, vector<1x256xf32>
    %6 = vector.broadcast %5 : vector<1x256xf32> to vector<2x256xf32>
    %7 = arith.mulf %1, %6 : vector<2x256xf32>
    %c16_i32 = arith.constant 16 : i32
    %8 = tpu.dynamic_rotate %0 by %c16_i32 dim 1 : vector<2x256xf32>, i32 -> vector<2x256xf32>
    %c1 = arith.constant 1 : index
    %c0_4 = arith.constant 0 : index
    %9 = vector.load %arg2[%c1, %c0_4] : memref<18x256xf32, #tpu.memory_space<vmem>>, vector<1x256xf32>
    %10 = vector.broadcast %9 : vector<1x256xf32> to vector<2x256xf32>
    %11 = arith.mulf %8, %10 : vector<2x256xf32>
    %c10 = arith.constant 10 : index
    %c0_5 = arith.constant 0 : index
    %12 = vector.load %arg2[%c10, %c0_5] : memref<18x256xf32, #tpu.memory_space<vmem>>, vector<1x256xf32>
    %13 = vector.broadcast %12 : vector<1x256xf32> to vector<2x256xf32>
    %14 = arith.mulf %8, %13 : vector<2x256xf32>
    %15 = arith.addf %4, %11 : vector<2x256xf32>
    %16 = arith.addf %7, %14 : vector<2x256xf32>
    %c15_i32 = arith.constant 15 : i32
    %17 = tpu.dynamic_rotate %0 by %c15_i32 dim 1 : vector<2x256xf32>, i32 -> vector<2x256xf32>
    %c2 = arith.constant 2 : index
    %c0_6 = arith.constant 0 : index
    %18 = vector.load %arg2[%c2, %c0_6] : memref<18x256xf32, #tpu.memory_space<vmem>>, vector<1x256xf32>
    %19 = vector.broadcast %18 : vector<1x256xf32> to vector<2x256xf32>
    %20 = arith.mulf %17, %19 : vector<2x256xf32>
    %c11 = arith.constant 11 : index
    %c0_7 = arith.constant 0 : index
    %21 = vector.load %arg2[%c11, %c0_7] : memref<18x256xf32, #tpu.memory_space<vmem>>, vector<1x256xf32>
    %22 = vector.broadcast %21 : vector<1x256xf32> to vector<2x256xf32>
    %23 = arith.mulf %17, %22 : vector<2x256xf32>
    %24 = arith.addf %15, %20 : vector<2x256xf32>
    %25 = arith.addf %16, %23 : vector<2x256xf32>
    %c1_i32 = arith.constant 1 : i32
    %26 = tpu.dynamic_rotate %0 by %c1_i32 dim 1 : vector<2x256xf32>, i32 -> vector<2x256xf32>
    %c3 = arith.constant 3 : index
    %c0_8 = arith.constant 0 : index
    %27 = vector.load %arg2[%c3, %c0_8] : memref<18x256xf32, #tpu.memory_space<vmem>>, vector<1x256xf32>
    %28 = vector.broadcast %27 : vector<1x256xf32> to vector<2x256xf32>
    %29 = arith.mulf %26, %28 : vector<2x256xf32>
    %c12 = arith.constant 12 : index
    %c0_9 = arith.constant 0 : index
    %30 = vector.load %arg2[%c12, %c0_9] : memref<18x256xf32, #tpu.memory_space<vmem>>, vector<1x256xf32>
    %31 = vector.broadcast %30 : vector<1x256xf32> to vector<2x256xf32>
    %32 = arith.mulf %26, %31 : vector<2x256xf32>
    %33 = arith.addf %24, %29 : vector<2x256xf32>
    %34 = arith.addf %25, %32 : vector<2x256xf32>
    %c4 = arith.constant 4 : index
    %c0_10 = arith.constant 0 : index
    %35 = vector.load %arg2[%c4, %c0_10] : memref<18x256xf32, #tpu.memory_space<vmem>>, vector<1x256xf32>
    %36 = vector.broadcast %35 : vector<1x256xf32> to vector<2x256xf32>
    %37 = arith.mulf %0, %36 : vector<2x256xf32>
    %c13 = arith.constant 13 : index
    %c0_11 = arith.constant 0 : index
    %38 = vector.load %arg2[%c13, %c0_11] : memref<18x256xf32, #tpu.memory_space<vmem>>, vector<1x256xf32>
    %39 = vector.broadcast %38 : vector<1x256xf32> to vector<2x256xf32>
    %40 = arith.mulf %0, %39 : vector<2x256xf32>
    %41 = arith.addf %33, %37 : vector<2x256xf32>
    %42 = arith.addf %34, %40 : vector<2x256xf32>
    %c255_i32 = arith.constant 255 : i32
    %43 = tpu.dynamic_rotate %0 by %c255_i32 dim 1 : vector<2x256xf32>, i32 -> vector<2x256xf32>
    %c5 = arith.constant 5 : index
    %c0_12 = arith.constant 0 : index
    %44 = vector.load %arg2[%c5, %c0_12] : memref<18x256xf32, #tpu.memory_space<vmem>>, vector<1x256xf32>
    %45 = vector.broadcast %44 : vector<1x256xf32> to vector<2x256xf32>
    %46 = arith.mulf %43, %45 : vector<2x256xf32>
    %c14 = arith.constant 14 : index
    %c0_13 = arith.constant 0 : index
    %47 = vector.load %arg2[%c14, %c0_13] : memref<18x256xf32, #tpu.memory_space<vmem>>, vector<1x256xf32>
    %48 = vector.broadcast %47 : vector<1x256xf32> to vector<2x256xf32>
    %49 = arith.mulf %43, %48 : vector<2x256xf32>
    %50 = arith.addf %41, %46 : vector<2x256xf32>
    %51 = arith.addf %42, %49 : vector<2x256xf32>
    %c241_i32 = arith.constant 241 : i32
    %52 = tpu.dynamic_rotate %0 by %c241_i32 dim 1 : vector<2x256xf32>, i32 -> vector<2x256xf32>
    %c6 = arith.constant 6 : index
    %c0_14 = arith.constant 0 : index
    %53 = vector.load %arg2[%c6, %c0_14] : memref<18x256xf32, #tpu.memory_space<vmem>>, vector<1x256xf32>
    %54 = vector.broadcast %53 : vector<1x256xf32> to vector<2x256xf32>
    %55 = arith.mulf %52, %54 : vector<2x256xf32>
    %c15 = arith.constant 15 : index
    %c0_15 = arith.constant 0 : index
    %56 = vector.load %arg2[%c15, %c0_15] : memref<18x256xf32, #tpu.memory_space<vmem>>, vector<1x256xf32>
    %57 = vector.broadcast %56 : vector<1x256xf32> to vector<2x256xf32>
    %58 = arith.mulf %52, %57 : vector<2x256xf32>
    %59 = arith.addf %50, %55 : vector<2x256xf32>
    %60 = arith.addf %51, %58 : vector<2x256xf32>
    %c240_i32 = arith.constant 240 : i32
    %61 = tpu.dynamic_rotate %0 by %c240_i32 dim 1 : vector<2x256xf32>, i32 -> vector<2x256xf32>
    %c7 = arith.constant 7 : index
    %c0_16 = arith.constant 0 : index
    %62 = vector.load %arg2[%c7, %c0_16] : memref<18x256xf32, #tpu.memory_space<vmem>>, vector<1x256xf32>
    %63 = vector.broadcast %62 : vector<1x256xf32> to vector<2x256xf32>
    %64 = arith.mulf %61, %63 : vector<2x256xf32>
    %c16 = arith.constant 16 : index
    %c0_17 = arith.constant 0 : index
    %65 = vector.load %arg2[%c16, %c0_17] : memref<18x256xf32, #tpu.memory_space<vmem>>, vector<1x256xf32>
    %66 = vector.broadcast %65 : vector<1x256xf32> to vector<2x256xf32>
    %67 = arith.mulf %61, %66 : vector<2x256xf32>
    %68 = arith.addf %59, %64 : vector<2x256xf32>
    %69 = arith.addf %60, %67 : vector<2x256xf32>
    %c239_i32 = arith.constant 239 : i32
    %70 = tpu.dynamic_rotate %0 by %c239_i32 dim 1 : vector<2x256xf32>, i32 -> vector<2x256xf32>
    %c8 = arith.constant 8 : index
    %c0_18 = arith.constant 0 : index
    %71 = vector.load %arg2[%c8, %c0_18] : memref<18x256xf32, #tpu.memory_space<vmem>>, vector<1x256xf32>
    %72 = vector.broadcast %71 : vector<1x256xf32> to vector<2x256xf32>
    %73 = arith.mulf %70, %72 : vector<2x256xf32>
    %c17 = arith.constant 17 : index
    %c0_19 = arith.constant 0 : index
    %74 = vector.load %arg2[%c17, %c0_19] : memref<18x256xf32, #tpu.memory_space<vmem>>, vector<1x256xf32>
    %75 = vector.broadcast %74 : vector<1x256xf32> to vector<2x256xf32>
    %76 = arith.mulf %70, %75 : vector<2x256xf32>
    %77 = arith.addf %68, %73 : vector<2x256xf32>
    %78 = arith.addf %69, %76 : vector<2x256xf32>
    %c0_20 = arith.constant 0 : index
    %79 = memref.load %arg3[%c0_20] : memref<2xf32, #tpu.memory_space<smem>>
    %80 = vector.broadcast %79 : f32 to vector<2x256xf32>
    %81 = arith.addf %77, %80 : vector<2x256xf32>
    %cst = arith.constant 5.000000e-02 : f32
    %82 = vector.broadcast %cst : f32 to vector<2x256xf32>
    %83 = arith.maximumf %81, %82 : vector<2x256xf32>
    %cst_21 = arith.constant 4.300000e-01 : f32
    %84 = vector.broadcast %cst_21 : f32 to vector<2x256xf32>
    %85 = arith.minimumf %83, %84 : vector<2x256xf32>
    %c1_22 = arith.constant 1 : index
    %86 = memref.load %arg3[%c1_22] : memref<2xf32, #tpu.memory_space<smem>>
    %87 = vector.broadcast %86 : f32 to vector<2x256xf32>
    %88 = arith.addf %78, %87 : vector<2x256xf32>
    %cst_23 = arith.constant 5.000000e-02 : f32
    %89 = vector.broadcast %cst_23 : f32 to vector<2x256xf32>
    %90 = arith.maximumf %88, %89 : vector<2x256xf32>
    %cst_24 = arith.constant 4.300000e-01 : f32
    %91 = vector.broadcast %cst_24 : f32 to vector<2x256xf32>
    %92 = arith.minimumf %90, %91 : vector<2x256xf32>
    %c0_25 = arith.constant 0 : index
    %c0_26 = arith.constant 0 : index
    %93 = memref.load %arg4[%c0_25, %c0_26] : memref<2x2xf32, #tpu.memory_space<smem>>
    %94 = vector.broadcast %93 : f32 to vector<2x256xf32>
    %95 = arith.mulf %85, %94 : vector<2x256xf32>
    %c0_27 = arith.constant 0 : index
    %c1_28 = arith.constant 1 : index
    %96 = memref.load %arg4[%c0_27, %c1_28] : memref<2x2xf32, #tpu.memory_space<smem>>
    %97 = vector.broadcast %96 : f32 to vector<2x256xf32>
    %98 = arith.mulf %92, %97 : vector<2x256xf32>
    %99 = arith.addf %95, %98 : vector<2x256xf32>
    %c0_29 = arith.constant 0 : index
    %100 = memref.load %arg5[%c0_29] : memref<2xf32, #tpu.memory_space<smem>>
    %101 = vector.broadcast %100 : f32 to vector<2x256xf32>
    %102 = arith.addf %99, %101 : vector<2x256xf32>
    %c1_30 = arith.constant 1 : index
    %c0_31 = arith.constant 0 : index
    %103 = memref.load %arg4[%c1_30, %c0_31] : memref<2x2xf32, #tpu.memory_space<smem>>
    %104 = vector.broadcast %103 : f32 to vector<2x256xf32>
    %105 = arith.mulf %85, %104 : vector<2x256xf32>
    %c1_32 = arith.constant 1 : index
    %c1_33 = arith.constant 1 : index
    %106 = memref.load %arg4[%c1_32, %c1_33] : memref<2x2xf32, #tpu.memory_space<smem>>
    %107 = vector.broadcast %106 : f32 to vector<2x256xf32>
    %108 = arith.mulf %92, %107 : vector<2x256xf32>
    %109 = arith.addf %105, %108 : vector<2x256xf32>
    %c1_34 = arith.constant 1 : index
    %110 = memref.load %arg5[%c1_34] : memref<2xf32, #tpu.memory_space<smem>>
    %111 = vector.broadcast %110 : f32 to vector<2x256xf32>
    %112 = arith.addf %109, %111 : vector<2x256xf32>
    %cst_35 = arith.constant 5.000000e-02 : f32
    %113 = vector.broadcast %cst_35 : f32 to vector<2x256xf32>
    %114 = arith.maximumf %102, %113 : vector<2x256xf32>
    %cst_36 = arith.constant 4.300000e-01 : f32
    %115 = vector.broadcast %cst_36 : f32 to vector<2x256xf32>
    %116 = arith.minimumf %114, %115 : vector<2x256xf32>
    %cst_37 = arith.constant 5.000000e-02 : f32
    %117 = vector.broadcast %cst_37 : f32 to vector<2x256xf32>
    %118 = arith.maximumf %112, %117 : vector<2x256xf32>
    %cst_38 = arith.constant 4.300000e-01 : f32
    %119 = vector.broadcast %cst_38 : f32 to vector<2x256xf32>
    %120 = arith.minimumf %118, %119 : vector<2x256xf32>
    %c0_39 = arith.constant 0 : index
    %c0_40 = arith.constant 0 : index
    %121 = vector.load %arg6[%c0_39, %c0_40] : memref<2x512xf32, #tpu.memory_space<vmem>>, vector<2x256xf32>
    tpu.vector_store %arg6[%c0_39, %c0_40], %116 {strides = array<i32>} : memref<2x512xf32, #tpu.memory_space<vmem>>, vector<2x256xf32>,
    %c0_41 = arith.constant 0 : index
    %c256 = arith.constant 256 : index
    %122 = vector.load %arg6[%c0_41, %c256] : memref<2x512xf32, #tpu.memory_space<vmem>>, vector<2x256xf32>
    tpu.vector_store %arg6[%c0_41, %c256], %120 {strides = array<i32>} : memref<2x512xf32, #tpu.memory_space<vmem>>, vector<2x256xf32>,
    return
  }
  func.func @transform_0(%arg0: i32) -> (i32, i32) {
    %c0_i32 = arith.constant 0 : i32
    %c0_i32_0 = arith.constant 0 : i32
    return %arg0, %c0_i32 : i32, i32
  }
  func.func @transform_1(%arg0: i32) -> (i32, i32) {
    %c0_i32 = arith.constant 0 : i32
    %c0_i32_0 = arith.constant 0 : i32
    %c0_i32_1 = arith.constant 0 : i32
    return %c0_i32, %c0_i32_0 : i32, i32
  }
  func.func @transform_2(%arg0: i32) -> i32 {
    %c0_i32 = arith.constant 0 : i32
    %c0_i32_0 = arith.constant 0 : i32
    return %c0_i32 : i32
  }
  func.func @transform_3(%arg0: i32) -> (i32, i32) {
    %c0_i32 = arith.constant 0 : i32
    %c0_i32_0 = arith.constant 0 : i32
    %c0_i32_1 = arith.constant 0 : i32
    return %c0_i32, %c0_i32_0 : i32, i32
  }
  func.func @transform_4(%arg0: i32) -> i32 {
    %c0_i32 = arith.constant 0 : i32
    %c0_i32_0 = arith.constant 0 : i32
    return %c0_i32 : i32
  }
  func.func @transform_5(%arg0: i32) -> (i32, i32) {
    %c0_i32 = arith.constant 0 : i32
    %c0_i32_0 = arith.constant 0 : i32
    return %arg0, %c0_i32 : i32, i32
  }
}

</mosaic_0001>

<llo_original>
// kernel: tpu_custom_call.1
$region0: #{tpu_custom_call.1}
  #allocation0 [shape = 'u32[]', space=smem, size = 0x4, offset = 0x4, fixed_abs, tag = 'smem constant byte address 0x4 - core index']
  #allocation1 [shape = 'u32[72,128]{1,0:T(1,128)}', space=vmem, size = 0x9000, scoped, tag = 'internal scratch']
  %s0 = inlined_call_operand.hbm [shape: f32[2,256], index: 0, kind: input, shape index: {}]
  %s1 = inlined_call_operand.hbm [shape: f32[18,256], index: 1, kind: input, shape index: {}]
  %s2 = inlined_call_operand.hbm [shape: f32[2], index: 2, kind: input, shape index: {}]
  %s3 = inlined_call_operand.vmem [shape: f32[2,2], index: 3, kind: input, shape index: {}]
  %s4 = inlined_call_operand.vmem [shape: f32[2], index: 4, kind: input, shape index: {}]
  %s5 = inlined_call_operand.hbm [shape: f32[2,512], index: 5, kind: output, shape index: {}]
  %s6 = sld [smem:[#allocation0]]
  $region50: #{tpu_custom_call.1} parent=0
    _
  %s8 = ssub.s32 1, %s6
  %s9 = scalar_select 0, %s8, %s6
  $region1: #{tpu_custom_call.1} parent=0
    #allocation2 [shape = 'u8[2048]{0}', space=vmem, size = 0x800, scoped, tag = 'input window, operand 0, single buffered']
    #allocation3 [shape = 's32[1]{0}', space=sflag, size = 0x4, scoped, tag = 'scoped memory for tpu_custom_call.1']
    #allocation4 [shape = 's32[1]{0}', space=sflag, size = 0x4, scoped, tag = 'scoped memory for tpu_custom_call.1']
    #allocation5 [shape = 's32[1]{0}', space=sflag, size = 0x4, scoped, tag = 'scoped memory for tpu_custom_call.1']
    #allocation6 [shape = 's32[1]{0}', space=sflag, size = 0x4, scoped, tag = 'scoped memory for tpu_custom_call.1']
    #allocation7 [shape = 'u8[24576]{0}', space=vmem, size = 0x6000, scoped, tag = 'input window, operand 1, single buffered']
    #allocation8 [shape = 's32[1]{0}', space=sflag, size = 0x4, scoped, tag = 'scoped memory for tpu_custom_call.1']
    #allocation9 [shape = 'u8[512]{0}', space=smem, size = 0x200, scoped, tag = 'input window, operand 2, single buffered']
    #allocation10 [shape = 'u8[1024]{0}', space=smem, size = 0x400, scoped, tag = 'input window, operand 3, single buffered']
    #allocation11 [shape = 'u8[512]{0}', space=smem, size = 0x200, scoped, tag = 'input window, operand 4, single buffered']
    #allocation12 [shape = 's32[1]{0}', space=sflag, size = 0x4, scoped, tag = 'scoped memory for tpu_custom_call.1']
    #allocation13 [shape = 'u8[4096]{0}', space=vmem, size = 0x1000, scoped, tag = 'output window, operand 0, single buffered']
    %10 = vsyncpa [#allocation3], 0
    %11 = vsyncpa [#allocation8], 0
    %12 = vsyncpa [#allocation5], 0
    %13 = vsyncpa [#allocation6], 0
    %14 = vsyncpa [#allocation12], 0
    %15 = vsyncpa [#allocation4], 0
    // Predicated region
    $region2: #{tpu_custom_call.1} parent=1 // pred_check
      _
    $region3: #{tpu_custom_call.1} parent=1 // pred_check_branch
      %17 = sbr.rel (0) target = $region5
    $region4: #{tpu_custom_call.1} parent=1 // pred_region
      %19 = vsyncadd [#allocation3], 0
      %s21 = sshll.u32 %s0, 4
      %s22 = int_to_ptr.hbm [resolvable:$true] %s21
      %s23 = sshll.u32 [#allocation2], 4
      %s24 = int_to_ptr.vmem [resolvable:$true] %s23
      %26 = dma.hbm_to_vmem [thread:$0]  %s22, 64, %s24, [#allocation3]
    $region5: #{tpu_custom_call.1} parent=1 // pred_fallthru
      _
    // Predicated region
    $region6: #{tpu_custom_call.1} parent=1 // pred_check
      _
    $region7: #{tpu_custom_call.1} parent=1 // pred_check_branch
      %28 = sbr.rel (0) target = $region9
    $region8: #{tpu_custom_call.1} parent=1 // pred_region
      %30 = vsyncadd [#allocation8], 0
      %s31 = sshll.u32 %s1, 4
      %s32 = int_to_ptr.hbm [resolvable:$true] %s31
      %s33 = sshll.u32 [#allocation7], 4
      %s34 = int_to_ptr.vmem [resolvable:$true] %s33
      %39 = dma.hbm_to_vmem [thread:$0]  %s32, 768, %s34, [#allocation8], 256, 256, 16
    $region9: #{tpu_custom_call.1} parent=1 // pred_fallthru
      _
    // Predicated region
    $region10: #{tpu_custom_call.1} parent=1 // pred_check
      _
    $region11: #{tpu_custom_call.1} parent=1 // pred_check_branch
      %41 = sbr.rel (0) target = $region13
    $region12: #{tpu_custom_call.1} parent=1 // pred_region
      %43 = vsyncadd [#allocation5], 0
      %s45 = sshll.u32 %s2, 4
      %s46 = int_to_ptr.hbm [resolvable:$true] %s45
      %48 = dma.hbm_to_smem %s46, 16, [#allocation9], [#allocation5]
    $region13: #{tpu_custom_call.1} parent=1 // pred_fallthru
      _
    // Predicated region
    $region14: #{tpu_custom_call.1} parent=1 // pred_check
      _
    $region15: #{tpu_custom_call.1} parent=1 // pred_check_branch
      %50 = sbr.rel (0) target = $region17
    $region16: #{tpu_custom_call.1} parent=1 // pred_region
      %52 = vsyncadd [#allocation6], 0
      %s54 = sshll.u32 %s3, 4
      %s55 = int_to_ptr.vmem [resolvable:$true] %s54
      %57 = dma.vmem_to_smem %s55, 32, [#allocation10], [#allocation6]
    $region17: #{tpu_custom_call.1} parent=1 // pred_fallthru
      _
    // Predicated region
    $region18: #{tpu_custom_call.1} parent=1 // pred_check
      _
    $region19: #{tpu_custom_call.1} parent=1 // pred_check_branch
      %59 = sbr.rel (0) target = $region21
    $region20: #{tpu_custom_call.1} parent=1 // pred_region
      %61 = vsyncadd [#allocation12], 0
      %s63 = sshll.u32 %s4, 4
      %s64 = int_to_ptr.vmem [resolvable:$true] %s63
      %66 = dma.vmem_to_smem %s64, 16, [#allocation11], [#allocation12]
    $region21: #{tpu_custom_call.1} parent=1 // pred_fallthru
      _
    // Predicated region
    $region22: #{tpu_custom_call.1} parent=1 // pred_check
      _
    $region23: #{tpu_custom_call.1} parent=1 // pred_check_branch
      %68 = sbr.rel (0) target = $region25
    $region24: #{tpu_custom_call.1} parent=1 // pred_region
      %70 = dma.done [#allocation3], 64
    $region25: #{tpu_custom_call.1} parent=1 // pred_fallthru
      _
    // Predicated region
    $region26: #{tpu_custom_call.1} parent=1 // pred_check
      _
    $region27: #{tpu_custom_call.1} parent=1 // pred_check_branch
      %72 = sbr.rel (0) target = $region29
    $region28: #{tpu_custom_call.1} parent=1 // pred_region
      %74 = dma.done [#allocation8], 768
    $region29: #{tpu_custom_call.1} parent=1 // pred_fallthru
      _
    // Predicated region
    $region30: #{tpu_custom_call.1} parent=1 // pred_check
      _
    $region31: #{tpu_custom_call.1} parent=1 // pred_check_branch
      %76 = sbr.rel (0) target = $region33
    $region32: #{tpu_custom_call.1} parent=1 // pred_region
      %78 = dma.done [#allocation5], 16
    $region33: #{tpu_custom_call.1} parent=1 // pred_fallthru
      _
    // Predicated region
    $region34: #{tpu_custom_call.1} parent=1 // pred_check
      _
    $region35: #{tpu_custom_call.1} parent=1 // pred_check_branch
      %80 = sbr.rel (0) target = $region37
    $region36: #{tpu_custom_call.1} parent=1 // pred_region
      %82 = dma.done [#allocation6], 32
    $region37: #{tpu_custom_call.1} parent=1 // pred_fallthru
      _
    // Predicated region
    $region38: #{tpu_custom_call.1} parent=1 // pred_check
      _
    $region39: #{tpu_custom_call.1} parent=1 // pred_check_branch
      %84 = sbr.rel (0) target = $region41
    $region40: #{tpu_custom_call.1} parent=1 // pred_region
      %86 = dma.done [#allocation12], 16
    $region41: #{tpu_custom_call.1} parent=1 // pred_fallthru
      _
    %87 = sfence
    %v88 = vld [vmem:[#allocation2] sm:$0xf]
    %90 = vst [vmem:[#allocation1] ss:$4 sm:$0xff] %v88
    %v91 = vld.sshfl [vmem:[#allocation1] sm:$0xff pattern:$0x73625140]
    %v92 = vld.sshfl [vmem:[#allocation1 + $0x8] sm:$0xff pattern:$0x73625140]
    %95 = vrot.lane.b32.xlu0 %v91, 17
    %v96 = vpop.permute.xlu0 %95
    %97 = vrot.lane.b32.xlu0 %v92, 17
    %v98 = vpop.permute.xlu0 %97
    %v99 = vlaneseq
    %v100 = vand.u32 %v99, 127
    %vm101 = vcmp.lt.s32.totalorder %v100, 17
    %v102 = vsel %vm101, %v96, %v98
    %v103 = vsel %vm101, %v98, %v96
    %v104 = vld [vmem:[#allocation7] ss:$8 sm:$0x3]
    %v106 = vperm.slane %v104, 0
    %v107 = vperm.slane %v104, 1
    %v110 = vmul.f32 %v103, %v106
    %v111 = vmul.f32 %v102, %v107
    %s112 = scalar_lea.vmem [#allocation7], 17
    %v113 = vld [vmem:[%s112] ss:$8 sm:$0x3]
    %v115 = vperm.slane %v113, 0
    %v116 = vperm.slane %v113, 1
    %v119 = vmul.f32 %v103, %v115
    %v120 = vmul.f32 %v102, %v116
    %121 = vst [vmem:[#allocation1] ss:$4 sm:$0xff] %v88
    %v122 = vld.sshfl [vmem:[#allocation1] sm:$0xff pattern:$0x73625140]
    %v123 = vld.sshfl [vmem:[#allocation1 + $0x8] sm:$0xff pattern:$0x73625140]
    %126 = vrot.lane.b32.xlu0 %v122, 16
    %v127 = vpop.permute.xlu0 %126
    %128 = vrot.lane.b32.xlu0 %v123, 16
    %v129 = vpop.permute.xlu0 %128
    %vm130 = vcmp.lt.s32.totalorder %v100, 16
    %v131 = vsel %vm130, %v127, %v129
    %v132 = vsel %vm130, %v129, %v127
    %s133 = scalar_lea.vmem [#allocation7], 1
    %v134 = vld [vmem:[%s133] ss:$8 sm:$0x3]
    %v136 = vperm.slane %v134, 0
    %v137 = vperm.slane %v134, 1
    %v140 = vmul.f32 %v132, %v136
    %v141 = vmul.f32 %v131, %v137
    %s142 = scalar_lea.vmem [#allocation7], 18
    %v143 = vld [vmem:[%s142] ss:$8 sm:$0x3]
    %v145 = vperm.slane %v143, 0
    %v146 = vperm.slane %v143, 1
    %v149 = vmul.f32 %v132, %v145
    %v150 = vmul.f32 %v131, %v146
    %v151 = vadd.f32 %v110, %v140
    %v152 = vadd.f32 %v111, %v141
    %v153 = vadd.f32 %v119, %v149
    %v154 = vadd.f32 %v120, %v150
    %155 = vst [vmem:[#allocation1] ss:$4 sm:$0xff] %v88
    %v156 = vld.sshfl [vmem:[#allocation1] sm:$0xff pattern:$0x73625140]
    %v157 = vld.sshfl [vmem:[#allocation1 + $0x8] sm:$0xff pattern:$0x73625140]
    %160 = vrot.lane.b32.xlu0 %v156, 15
    %v161 = vpop.permute.xlu0 %160
    %162 = vrot.lane.b32.xlu0 %v157, 15
    %v163 = vpop.permute.xlu0 %162
    %vm164 = vcmp.lt.s32.totalorder %v100, 15
    %v165 = vsel %vm164, %v161, %v163
    %v166 = vsel %vm164, %v163, %v161
    %s167 = scalar_lea.vmem [#allocation7], 2
    %v168 = vld [vmem:[%s167] ss:$8 sm:$0x3]
    %v170 = vperm.slane %v168, 0
    %v171 = vperm.slane %v168, 1
    %v174 = vmul.f32 %v166, %v170
    %v175 = vmul.f32 %v165, %v171
    %s176 = scalar_lea.vmem [#allocation7], 19
    %v177 = vld [vmem:[%s176] ss:$8 sm:$0x3]
    %v179 = vperm.slane %v177, 0
    %v180 = vperm.slane %v177, 1
    %v183 = vmul.f32 %v166, %v179
    %v184 = vmul.f32 %v165, %v180
    %v185 = vadd.f32 %v151, %v174
    %v186 = vadd.f32 %v152, %v175
    %v187 = vadd.f32 %v153, %v183
    %v188 = vadd.f32 %v154, %v184
    %189 = vst [vmem:[#allocation1] ss:$4 sm:$0xff] %v88
    %v190 = vld.sshfl [vmem:[#allocation1] sm:$0xff pattern:$0x73625140]
    %v191 = vld.sshfl [vmem:[#allocation1 + $0x8] sm:$0xff pattern:$0x73625140]
    %194 = vrot.lane.b32.xlu0 %v190, 1
    %v195 = vpop.permute.xlu0 %194
    %196 = vrot.lane.b32.xlu0 %v191, 1
    %v197 = vpop.permute.xlu0 %196
    %vm198 = vcmp.lt.s32.totalorder %v100, 1
    %v199 = vsel %vm198, %v195, %v197
    %v200 = vsel %vm198, %v197, %v195
    %s201 = scalar_lea.vmem [#allocation7], 3
    %v202 = vld [vmem:[%s201] ss:$8 sm:$0x3]
    %v204 = vperm.slane %v202, 0
    %v205 = vperm.slane %v202, 1
    %v208 = vmul.f32 %v200, %v204
    %v209 = vmul.f32 %v199, %v205
    %s210 = scalar_lea.vmem [#allocation7], 20
    %v211 = vld [vmem:[%s210] ss:$8 sm:$0x3]
    %v213 = vperm.slane %v211, 0
    %v214 = vperm.slane %v211, 1
    %v217 = vmul.f32 %v200, %v213
    %v218 = vmul.f32 %v199, %v214
    %v219 = vadd.f32 %v185, %v208
    %v220 = vadd.f32 %v186, %v209
    %v221 = vadd.f32 %v187, %v217
    %v222 = vadd.f32 %v188, %v218
    %s223 = scalar_lea.vmem [#allocation7], 4
    %v224 = vld [vmem:[%s223] ss:$8 sm:$0x3]
    %v226 = vperm.slane %v224, 0
    %v227 = vperm.slane %v224, 1
    %v228 = vrot.slane %v227, 6
    %vm229 = vcmask 1041408
    %v230 = vsel %vm229, %v226, %v228
    %v232 = vmul.f32 %v88, %v230
    %s233 = scalar_lea.vmem [#allocation7], 21
    %v234 = vld [vmem:[%s233] ss:$8 sm:$0x3]
    %v236 = vperm.slane %v234, 0
    %v237 = vperm.slane %v234, 1
    %v238 = vrot.slane %v237, 6
    %v239 = vsel %vm229, %v236, %v238
    %v241 = vmul.f32 %v88, %v239
    %243 = vst [vmem:[#allocation1] ss:$4 sm:$0xff] %v232
    %v244 = vld.sshfl [vmem:[#allocation1] sm:$0xff pattern:$0x73625140]
    %v245 = vld.sshfl [vmem:[#allocation1 + $0x8] sm:$0xff pattern:$0x73625140]
    %v248 = vadd.f32 %v219, %v244
    %v249 = vadd.f32 %v220, %v245
    %251 = vst [vmem:[#allocation1] ss:$4 sm:$0xff] %v241
    %v252 = vld.sshfl [vmem:[#allocation1] sm:$0xff pattern:$0x73625140]
    %v253 = vld.sshfl [vmem:[#allocation1 + $0x8] sm:$0xff pattern:$0x73625140]
    %v256 = vadd.f32 %v221, %v252
    %v257 = vadd.f32 %v222, %v253
    %258 = vst [vmem:[#allocation1] ss:$4 sm:$0xff] %v88
    %v259 = vld.sshfl [vmem:[#allocation1] sm:$0xff pattern:$0x73625140]
    %v260 = vld.sshfl [vmem:[#allocation1 + $0x8] sm:$0xff pattern:$0x73625140]
    %263 = vrot.lane.b32.xlu0 %v259, 127
    %v264 = vpop.permute.xlu0 %263
    %265 = vrot.lane.b32.xlu0 %v260, 127
    %v266 = vpop.permute.xlu0 %265
    %vm267 = vcmp.lt.s32.totalorder %v100, 127
    %v268 = vsel %vm267, %v264, %v266
    %v269 = vsel %vm267, %v266, %v264
    %s270 = scalar_lea.vmem [#allocation7], 5
    %v271 = vld [vmem:[%s270] ss:$8 sm:$0x3]
    %v273 = vperm.slane %v271, 0
    %v274 = vperm.slane %v271, 1
    %v277 = vmul.f32 %v268, %v273
    %v278 = vmul.f32 %v269, %v274
    %s279 = scalar_lea.vmem [#allocation7], 22
    %v280 = vld [vmem:[%s279] ss:$8 sm:$0x3]
    %v282 = vperm.slane %v280, 0
    %v283 = vperm.slane %v280, 1
    %v286 = vmul.f32 %v268, %v282
    %v287 = vmul.f32 %v269, %v283
    %v288 = vadd.f32 %v248, %v277
    %v289 = vadd.f32 %v249, %v278
    %v290 = vadd.f32 %v256, %v286
    %v291 = vadd.f32 %v257, %v287
    %292 = vst [vmem:[#allocation1] ss:$4 sm:$0xff] %v88
    %v293 = vld.sshfl [vmem:[#allocation1] sm:$0xff pattern:$0x73625140]
    %v294 = vld.sshfl [vmem:[#allocation1 + $0x8] sm:$0xff pattern:$0x73625140]
    %297 = vrot.lane.b32.xlu0 %v293, 113
    %v298 = vpop.permute.xlu0 %297
    %299 = vrot.lane.b32.xlu0 %v294, 113
    %v300 = vpop.permute.xlu0 %299
    %vm301 = vcmp.lt.s32.totalorder %v100, 113
    %v302 = vsel %vm301, %v298, %v300
    %v303 = vsel %vm301, %v300, %v298
    %s304 = scalar_lea.vmem [#allocation7], 6
    %v305 = vld [vmem:[%s304] ss:$8 sm:$0x3]
    %v307 = vperm.slane %v305, 0
    %v308 = vperm.slane %v305, 1
    %v311 = vmul.f32 %v302, %v307
    %v312 = vmul.f32 %v303, %v308
    %s313 = scalar_lea.vmem [#allocation7], 23
    %v314 = vld [vmem:[%s313] ss:$8 sm:$0x3]
    %v316 = vperm.slane %v314, 0
    %v317 = vperm.slane %v314, 1
    %v320 = vmul.f32 %v302, %v316
    %v321 = vmul.f32 %v303, %v317
    %v322 = vadd.f32 %v288, %v311
    %v323 = vadd.f32 %v289, %v312
    %v324 = vadd.f32 %v290, %v320
    %v325 = vadd.f32 %v291, %v321
    %326 = vst [vmem:[#allocation1] ss:$4 sm:$0xff] %v88
    %v327 = vld.sshfl [vmem:[#allocation1] sm:$0xff pattern:$0x73625140]
    %v328 = vld.sshfl [vmem:[#allocation1 + $0x8] sm:$0xff pattern:$0x73625140]
    %331 = vrot.lane.b32.xlu0 %v327, 112
    %v332 = vpop.permute.xlu0 %331
    %333 = vrot.lane.b32.xlu0 %v328, 112
    %v334 = vpop.permute.xlu0 %333
    %vm335 = vcmp.lt.s32.totalorder %v100, 112
    %v336 = vsel %vm335, %v332, %v334
    %v337 = vsel %vm335, %v334, %v332
    %s338 = scalar_lea.vmem [#allocation7], 7
    %v339 = vld [vmem:[%s338] ss:$8 sm:$0x3]
    %v341 = vperm.slane %v339, 0
    %v342 = vperm.slane %v339, 1
    %v345 = vmul.f32 %v336, %v341
    %v346 = vmul.f32 %v337, %v342
    %s347 = scalar_lea.vmem [#allocation7], 32
    %v348 = vld [vmem:[%s347] ss:$8 sm:$0x3]
    %v350 = vperm.slane %v348, 0
    %v351 = vperm.slane %v348, 1
    %v354 = vmul.f32 %v336, %v350
    %v355 = vmul.f32 %v337, %v351
    %v356 = vadd.f32 %v322, %v345
    %v357 = vadd.f32 %v323, %v346
    %v358 = vadd.f32 %v324, %v354
    %v359 = vadd.f32 %v325, %v355
    %360 = vst [vmem:[#allocation1] ss:$4 sm:$0xff] %v88
    %v361 = vld.sshfl [vmem:[#allocation1] sm:$0xff pattern:$0x73625140]
    %v362 = vld.sshfl [vmem:[#allocation1 + $0x8] sm:$0xff pattern:$0x73625140]
    %365 = vrot.lane.b32.xlu0 %v361, 111
    %v366 = vpop.permute.xlu0 %365
    %367 = vrot.lane.b32.xlu0 %v362, 111
    %v368 = vpop.permute.xlu0 %367
    %vm369 = vcmp.lt.s32.totalorder %v100, 111
    %v370 = vsel %vm369, %v366, %v368
    %v371 = vsel %vm369, %v368, %v366
    %s372 = scalar_lea.vmem [#allocation7], 16
    %v373 = vld [vmem:[%s372] ss:$8 sm:$0x3]
    %v375 = vperm.slane %v373, 0
    %v376 = vperm.slane %v373, 1
    %v379 = vmul.f32 %v370, %v375
    %v380 = vmul.f32 %v371, %v376
    %s381 = scalar_lea.vmem [#allocation7], 33
    %v382 = vld [vmem:[%s381] ss:$8 sm:$0x3]
    %v384 = vperm.slane %v382, 0
    %v385 = vperm.slane %v382, 1
    %v388 = vmul.f32 %v370, %v384
    %v389 = vmul.f32 %v371, %v385
    %v390 = vadd.f32 %v356, %v379
    %v391 = vadd.f32 %v357, %v380
    %v392 = vadd.f32 %v358, %v388
    %v393 = vadd.f32 %v359, %v389
    %s394 = sld [smem:[#allocation9]]
    %v395 = vstv %s394
    %v396 = vadd.f32 %v390, %v395
    %v397 = vadd.f32 %v391, %v395
    %v398 = vmax.f32 %v396, 0.05
    %v399 = vmax.f32 %v397, 0.05
    %v400 = vmin.f32 %v398, 0.43
    %v401 = vmin.f32 %v399, 0.43
    %s402 = sld [smem:[#allocation9 + $0x1]]
    %v403 = vstv %s402
    %v404 = vadd.f32 %v392, %v403
    %v405 = vadd.f32 %v393, %v403
    %v406 = vmax.f32 %v404, 0.05
    %v407 = vmax.f32 %v405, 0.05
    %v408 = vmin.f32 %v406, 0.43
    %v409 = vmin.f32 %v407, 0.43
    %s410 = sld [smem:[#allocation10]]
    %v411 = vstv %s410
    %v412 = vmul.f32 %v400, %v411
    %v413 = vmul.f32 %v401, %v411
    %s414 = sld [smem:[#allocation10 + $0x1]]
    %v415 = vstv %s414
    %v416 = vmul.f32 %v408, %v415
    %v417 = vmul.f32 %v409, %v415
    %v418 = vadd.f32 %v412, %v416
    %v419 = vadd.f32 %v413, %v417
    %s420 = sld [smem:[#allocation11]]
    %v421 = vstv %s420
    %v422 = vadd.f32 %v418, %v421
    %v423 = vadd.f32 %v419, %v421
    %s424 = sld [smem:[#allocation10 + $0x80]]
    %v425 = vstv %s424
    %v426 = vmul.f32 %v400, %v425
    %v427 = vmul.f32 %v401, %v425
    %s428 = sld [smem:[#allocation10 + $0x81]]
    %v429 = vstv %s428
    %v430 = vmul.f32 %v408, %v429
    %v431 = vmul.f32 %v409, %v429
    %v432 = vadd.f32 %v426, %v430
    %v433 = vadd.f32 %v427, %v431
    %s434 = sld [smem:[#allocation11 + $0x1]]
    %v435 = vstv %s434
    %v436 = vadd.f32 %v432, %v435
    %v437 = vadd.f32 %v433, %v435
    %v438 = vmax.f32 %v422, 0.05
    %v439 = vmax.f32 %v423, 0.05
    %v440 = vmin.f32 %v438, 0.43
    %v441 = vmin.f32 %v439, 0.43
    %v442 = vmax.f32 %v436, 0.05
    %v443 = vmax.f32 %v437, 0.05
    %v444 = vmin.f32 %v442, 0.43
    %v445 = vmin.f32 %v443, 0.43
    %v448 = vrot.slane %v441, 6
    %v449 = vsel %vm229, %v440, %v448
    %451 = vst [vmem:[#allocation13] sm:$0xf] %v449
    %v454 = vrot.slane %v445, 6
    %v455 = vsel %vm229, %v444, %v454
    %457 = vst [vmem:[#allocation13 + $0x4] sm:$0xf] %v455
    // Predicated region
    $region42: #{tpu_custom_call.1} parent=1 // pred_check
      _
    $region43: #{tpu_custom_call.1} parent=1 // pred_check_branch
      %459 = sbr.rel (0) target = $region45
    $region44: #{tpu_custom_call.1} parent=1 // pred_region
      %461 = vsyncadd [#allocation4], 0
      %s463 = sshll.u32 [#allocation13], 4
      %s464 = int_to_ptr.vmem [resolvable:$true] %s463
      %s465 = sshll.u32 %s5, 4
      %s466 = int_to_ptr.hbm [resolvable:$true] %s465
      %468 = dma.vmem_to_hbm [thread:$0]  %s464, 128, %s466, [#allocation4]
    $region45: #{tpu_custom_call.1} parent=1 // pred_fallthru
      _
    // Predicated region
    $region46: #{tpu_custom_call.1} parent=1 // pred_check
      _
    $region47: #{tpu_custom_call.1} parent=1 // pred_check_branch
      %470 = sbr.rel (0) target = $region49
    $region48: #{tpu_custom_call.1} parent=1 // pred_region
      %472 = dma.done [#allocation4], 128
    $region49: #{tpu_custom_call.1} parent=1 // pred_fallthru
      _
    %473 = vsyncpa [#allocation3], 1
    %474 = vsyncpa [#allocation8], 1
    %475 = vsyncpa [#allocation4], 1
    %476 = vsyncpa [#allocation5], 1
    %477 = vsyncpa [#allocation6], 1
    %478 = vsyncpa [#allocation12], 1

</llo_original>
